<compile_context>
chip_gen: v5e
topology: v5e:2x2
jax: 0.10.0
libtpu: 0.0.40
codegen_flags: <defaults>
</compile_context>

<pallas_src>
import math

import jax
import jax.numpy as jnp
from jax import lax
from jax.experimental import pallas as pl
from jax.experimental.pallas import tpu as pltpu


KERNEL_SIZE = 25  # DLinear's fixed moving-average window


def _dlinear_kernel(x_ref, w_ref, b_ref, o_ref):
    """One (batch-block, channel-tile) grid point.

    x_ref : (Bb, L, TC) input slab  (seq on sublanes, channels on lanes)
    w_ref : (L, L)      fused operator  W_eff = Ws @ (I - A) + Wt @ A
    b_ref : (L, 1)      fused bias      bs + bt   (broadcast along lanes)
    o_ref : (Bb, L, TC) output slab, already in (B, pred_len, C) layout
    """
    w = w_ref[...]
    b = b_ref[...]
    # Small static unroll over the batches folded into this block; each
    # iteration is one MXU matmul with the weight held resident.
    for i in range(x_ref.shape[0]):
        y = jnp.dot(w, x_ref[i], preferred_element_type=jnp.float32) + b
        o_ref[i] = y.astype(o_ref.dtype)


def build_moving_avg_matrix(seq_len, kernel_size):
    """Static (L, L) operator A with trend = A @ x, replicating moving_avg():
    edge-replicate pad by (k-1)//2 on both sides, then window-average."""
    pad = (kernel_size - 1) // 2
    pos = jnp.arange(seq_len)[:, None] + jnp.arange(kernel_size)[None, :] - pad
    pos = jnp.clip(pos, 0, seq_len - 1)                               # (L, k)
    return jax.nn.one_hot(pos, seq_len, dtype=jnp.float32).sum(axis=1) / kernel_size


def _pick_channel_tile(C):
    """Widest lane-dense tile that divides C (MXU is 256 wide on v6e/v7x)."""
    for tc in (512, 384, 256, 128):
        if C % tc == 0:
            return tc
    return C  # full channel dim as a single block (allowed for any C)


def _pick_batch_block(B, n_channel_tiles, per_batch_block_bytes,
                      max_block_bytes=4 << 20, max_unroll=8):
    """Fold as many batches per step as VMEM/unroll allow while keeping >= 2
    grid steps when possible (2 TensorCores on v7x)."""
    cap = max(1, min(max_unroll, max_block_bytes // max(1, per_batch_block_bytes)))
    cap = min(cap, B)
    for bb in range(cap, 0, -1):
        if B % bb == 0 and (B // bb) * n_channel_tiles >= 2:
            return bb
    for bb in range(cap, 0, -1):
        if B % bb == 0:
            return bb
    return 1


def make_dlinear_forward(params, seq_len, *, kernel_size=KERNEL_SIZE,
                         io_dtype=jnp.float32):
    """Precompute the fused operator/bias once; return a jitted x -> out fn.

    Equivalent to Dlinear.forward (individual=False)."""
    A = build_moving_avg_matrix(seq_len, kernel_size)
    eye = jnp.eye(seq_len, dtype=jnp.float32)
    hi = lax.Precision.HIGHEST
    ws = params["ws"].astype(jnp.float32)
    wt = params["wt"].astype(jnp.float32)
    w_eff = (jnp.dot(ws, eye - A, precision=hi)
             + jnp.dot(wt, A, precision=hi)).astype(io_dtype)          # (L, L)
    bias = (params["bs"] + params["bt"]).astype(jnp.float32).reshape(seq_len, 1)

    itemsize = jnp.dtype(io_dtype).itemsize

    @jax.jit
    def forward(x):
        B, L, C = x.shape
        assert L == seq_len, "x sequence length must equal win_size"
        x_io = x.astype(io_dtype)

        tc = _pick_channel_tile(C)
        n_ct = C // tc
        bb = _pick_batch_block(B, n_ct, L * tc * itemsize)
        grid = (B // bb, n_ct)

        act_spec = pl.BlockSpec((bb, L, tc), lambda b, c: (b, 0, c))
        mat_spec = pl.BlockSpec((L, L), lambda b, c: (0, 0))
        bias_spec = pl.BlockSpec((L, 1), lambda b, c: (0, 0))

        return pl.pallas_call(
            _dlinear_kernel,
            grid=grid,
            in_specs=[act_spec, mat_spec, bias_spec],
            out_specs=act_spec,
            out_shape=jax.ShapeDtypeStruct((B, L, C), io_dtype),
            compiler_params=pltpu.CompilerParams(
                dimension_semantics=("parallel", "parallel")),
        )(x_io, w_eff, bias)

    return forward


def dlinear_reference(x, params, kernel_size=KERNEL_SIZE):
    """Pure-JAX reference mirroring the PyTorch module, for validation."""
    B, L, C = x.shape
    pad = (kernel_size - 1) // 2
    front = jnp.repeat(x[:, :1, :], pad, axis=1)
    end = jnp.repeat(x[:, -1:, :], pad, axis=1)
    xp = jnp.concatenate([front, x, end], axis=1)                     # (B, L+2*pad, C)
    win = jnp.arange(L)[:, None] + jnp.arange(kernel_size)[None, :]   # (L, k)
    trend = jnp.mean(xp[:, win, :], axis=2)                           # (B, L, C)
    seasonal = x - trend

    hi = lax.Precision.HIGHEST
    out = (jnp.einsum("blc,pl->bpc", seasonal, params["ws"], precision=hi)
           + jnp.einsum("blc,pl->bpc", trend, params["wt"], precision=hi)
           + (params["bs"] + params["bt"])[None, :, None])
    return out                                                        # (B, pred_len, C)


def init_params(key, seq_len, random_weights=False):
    """Mirror the module init: weight = (1/seq_len) * ones, bias ~ U(+-1/sqrt(L)).
    random_weights=True simulates trained (arbitrary) weights for a stronger check."""
    pred_len = seq_len
    bound = 1.0 / math.sqrt(seq_len)
    k1, k2, k3, k4 = jax.random.split(key, 4)
    if random_weights:
        ws = jax.random.uniform(k1, (pred_len, seq_len), jnp.float32, -bound, bound)
        wt = jax.random.uniform(k2, (pred_len, seq_len), jnp.float32, -bound, bound)
    else:
        ws = jnp.full((pred_len, seq_len), 1.0 / seq_len, jnp.float32)
        wt = jnp.full((pred_len, seq_len), 1.0 / seq_len, jnp.float32)
    bs = jax.random.uniform(k3, (pred_len,), jnp.float32, -bound, bound)
    bt = jax.random.uniform(k4, (pred_len,), jnp.float32, -bound, bound)
    return {"ws": ws, "wt": wt, "bs": bs, "bt": bt}


if __name__ == "__main__":
    B, L, C = 2, 64, 128   # batch, win_size (= seq_len = pred_len), enc_in channels

    root = jax.random.PRNGKey(0)
    kx, kp0, kp1 = jax.random.split(root, 3)
    x = jax.random.normal(kx, (B, L, C), dtype=jnp.float32)

    # f32 I/O path: check both the module's prescribed init and arbitrary
    # ("trained") weights against the pure-JAX reference.
    for random_weights, kp in ((False, kp0), (True, kp1)):
        params = init_params(kp, L, random_weights=random_weights)
        fwd = make_dlinear_forward(params, L)
        out = jax.block_until_ready(fwd(x))
        ref = dlinear_reference(x, params)
        assert out.shape == (B, L, C)
        assert jnp.allclose(out, ref, rtol=1e-3, atol=1e-3), "f32 mismatch vs reference"

    # bf16 I/O path (f32 MXU accumulation): halves HBM bytes; looser tolerance.
    params = init_params(kp1, L, random_weights=True)
    fwd_bf16 = make_dlinear_forward(params, L, io_dtype=jnp.bfloat16)
    out_bf16 = jax.block_until_ready(fwd_bf16(x)).astype(jnp.float32)
    ref = dlinear_reference(x, params)
    assert jnp.allclose(out_bf16, ref, rtol=5e-2, atol=5e-2), "bf16 mismatch vs reference"

    print("KERNEL_OK")
</pallas_src>

<mosaic_0001>
module attributes {stable_mosaic.version = 11 : i64} {
  func.func @_dlinear_kernel(%arg0: i32, %arg1: i32, %arg2: memref<1x64x128xf32, #tpu.memory_space<vmem>>, %arg3: memref<64x64xf32, #tpu.memory_space<vmem>>, %arg4: memref<64x1xf32, #tpu.memory_space<vmem>>, %arg5: memref<1x64x128xf32, #tpu.memory_space<vmem>>) attributes {dimension_semantics = [#tpu.dimension_semantics<parallel>, #tpu.dimension_semantics<parallel>], iteration_bounds = array<i64: 2, 1>, scalar_prefetch = 0 : i64, scratch_operands = 0 : i64, tpu.core_type = #tpu.core_type<tc>, window_params = [{transform_indices = @transform_0, window_bounds = array<i64: 1, 64, 128>}, {pipeline_mode = #tpu.pipeline_mode<synchronous>, transform_indices = @transform_1, window_bounds = array<i64: 64, 64>}, {pipeline_mode = #tpu.pipeline_mode<synchronous>, transform_indices = @transform_2, window_bounds = array<i64: 64, 1>}, {transform_indices = @transform_3, window_bounds = array<i64: 1, 64, 128>}]} {
    %c0 = arith.constant 0 : index
    %c0_0 = arith.constant 0 : index
    %0 = vector.load %arg3[%c0, %c0_0] : memref<64x64xf32, #tpu.memory_space<vmem>>, vector<64x64xf32>
    %c0_1 = arith.constant 0 : index
    %c0_2 = arith.constant 0 : index
    %1 = vector.load %arg4[%c0_1, %c0_2] : memref<64x1xf32, #tpu.memory_space<vmem>>, vector<64x1xf32>
    %c0_3 = arith.constant 0 : index
    %c0_4 = arith.constant 0 : index
    %c0_5 = arith.constant 0 : index
    %2 = vector.load %arg2[%c0_3, %c0_4, %c0_5] : memref<1x64x128xf32, #tpu.memory_space<vmem>>, vector<1x64x128xf32>
    %3 = vector.shape_cast %2 : vector<1x64x128xf32> to vector<64x128xf32>
    %cst = arith.constant dense<0.000000e+00> : vector<64x128xf32>
    %4 = tpu.matmul %0, %3, %cst {dimension_numbers = #tpu.dot_dimension_numbers<[1], [0], [0], [1], [0, 0, 1, 1], [], []>} : vector<64x64xf32>, vector<64x128xf32>, vector<64x128xf32> -> vector<64x128xf32>
    %5 = vector.broadcast %1 : vector<64x1xf32> to vector<64x128xf32>
    %6 = arith.addf %4, %5 : vector<64x128xf32>
    %c0_6 = arith.constant 0 : index
    %c0_7 = arith.constant 0 : index
    %c0_8 = arith.constant 0 : index
    %7 = vector.load %arg5[%c0_6, %c0_7, %c0_8] : memref<1x64x128xf32, #tpu.memory_space<vmem>>, vector<1x64x128xf32>
    %8 = vector.shape_cast %7 : vector<1x64x128xf32> to vector<64x128xf32>
    %9 = vector.shape_cast %6 : vector<64x128xf32> to vector<1x64x128xf32>
    tpu.vector_store %arg5[%c0_6, %c0_7, %c0_8], %9 {strides = array<i32>} : memref<1x64x128xf32, #tpu.memory_space<vmem>>, vector<1x64x128xf32>,
    return
  }
  func.func @transform_0(%arg0: i32, %arg1: i32) -> (i32, i32, i32) {
    %c0_i32 = arith.constant 0 : i32
    %c0_i32_0 = arith.constant 0 : i32
    return %arg0, %c0_i32, %arg1 : i32, i32, i32
  }
  func.func @transform_1(%arg0: i32, %arg1: i32) -> (i32, i32) {
    %c0_i32 = arith.constant 0 : i32
    %c0_i32_0 = arith.constant 0 : i32
    %c0_i32_1 = arith.constant 0 : i32
    return %c0_i32, %c0_i32_0 : i32, i32
  }
  func.func @transform_2(%arg0: i32, %arg1: i32) -> (i32, i32) {
    %c0_i32 = arith.constant 0 : i32
    %c0_i32_0 = arith.constant 0 : i32
    %c0_i32_1 = arith.constant 0 : i32
    return %c0_i32, %c0_i32_0 : i32, i32
  }
  func.func @transform_3(%arg0: i32, %arg1: i32) -> (i32, i32, i32) {
    %c0_i32 = arith.constant 0 : i32
    %c0_i32_0 = arith.constant 0 : i32
    return %arg0, %c0_i32, %arg1 : i32, i32, i32
  }
}

</mosaic_0001>

<llo_original>
// kernel: forward.1
$region0: #{forward.1}
  #allocation0 [shape = 'u32[]', space=smem, size = 0x4, offset = 0x4, fixed_abs, tag = 'smem constant byte address 0x4 - core index']
  #allocation1 [shape = 'u32[72,128]{1,0:T(1,128)}', space=vmem, size = 0x9000, scoped, tag = 'internal scratch']
  %s0 = inlined_call_operand.hbm [shape: f32[2,64,128], index: 0, kind: input, shape index: {}]
  %s1 = inlined_call_operand.hbm [shape: f32[64,64], index: 1, kind: input, shape index: {}]
  %s2 = inlined_call_operand.hbm [shape: f32[64,1], index: 2, kind: input, shape index: {}]
  %s3 = inlined_call_operand.hbm [shape: f32[2,64,128], index: 3, kind: output, shape index: {}]
  %s4 = sld [smem:[#allocation0]]
  $region57: #{forward.1} parent=0
    _
  %s6 = ssub.s32 1, %s4
  %s7 = scalar_select 0, %s6, %s4
  $region1: #{forward.1} parent=0
    #allocation2 [shape = 'u8[65536]{0}', space=vmem, size = 0x10000, scoped, tag = 'input window, operand 0']
    #allocation3 [shape = 's32[2]{0}', space=sflag, size = 0x8, scoped, tag = 'scoped memory for forward.1']
    #allocation4 [shape = 's32[2]{0}', space=sflag, size = 0x8, scoped, tag = 'scoped memory for forward.1']
    #allocation5 [shape = 'u8[32768]{0}', space=vmem, size = 0x8000, scoped, tag = 'input window, operand 1, single buffered']
    #allocation6 [shape = 's32[1]{0}', space=sflag, size = 0x4, scoped, tag = 'scoped memory for forward.1']
    #allocation7 [shape = 'u8[32768]{0}', space=vmem, size = 0x8000, scoped, tag = 'input window, operand 2, single buffered']
    #allocation8 [shape = 'u8[65536]{0}', space=vmem, size = 0x10000, scoped, tag = 'output window, operand 0']
    %8 = vsyncpa [#allocation3], 0
    %s9 = scalar_lea.sflag [#allocation3], 1
    %10 = vsyncpa %s9, 0
    %11 = vsyncpa [#allocation6], 0
    %12 = vsyncpa [#allocation4], 0
    %s13 = scalar_lea.sflag [#allocation4], 1
    %14 = vsyncpa %s13, 0
    loop: start=0, step=1, limit=4
    $region2: #{forward.1} parent=1 // loop_pre_header
      _
    $region3: #{forward.1} parent=1 // loop_header
      %s16 = sphi 0, %s20
      %p17 = scmp.ge.s32.totalorder %s16, 4
      %s23 = sphi 0, %s35
      %s24 = sphi 0, %s31
      %s25 = sphi 0, %s23
      %s26 = sphi 0, %s24
      %s27 = sphi 0, %s25
      %s28 = sphi 0, %s26
      %s40 = sphi 0, %s42
      %s43 = sphi 0, %s40
      %s44 = sphi 0, %s43
      %s60 = sphi 0, %s44
      %s64 = sphi 0, %s64
      %s66 = sphi 0, %s64
      %s67 = sphi 0, %s66
      %s81 = sphi 0, %s67
      %s85 = sphi 0, %s85
      %s87 = sphi 0, %s85
      %s88 = sphi 0, %s87
      %s102 = sphi 0, %s88
      %s110 = sphi 0, %s112
      %s113 = sphi 0, %s110
      %s114 = sphi 0, %s113
      %s130 = sphi 0, %s114
    $region4: #{forward.1} parent=1 // loop_header_branch
      %19 = sbr.rel (%p17) target = $region8
    $region5: #{forward.1} parent=1 // loop_body
      %s21 = ssub.s32 %s16, 1
      %s22 = ssub.s32 %s16, 2
      %s29 = sadd.s32 1, %s24
      %p30 = scmp.ge.s32.totalorder %s29, 1
      %s31 = scalar_select %p30, 0, %s29
      %s32 = sadd.s32 1, %s23
      %s33 = scalar_select %p30, %s32, %s23
      %p34 = scmp.ge.s32.totalorder %s33, 2
      %s35 = scalar_select %p34, 0, %s33
      %s36 = ssub.s32 %s23, %s35
      %s37 = ssub.s32 %s24, %s31
      %s38 = sor.u32 %s36, %s37
      %p39 = scmp.eq.s32.totalorder %s38, 0
      %s41 = sadd.s32 %s40, 1
      %s42 = scalar_select %p39, %s40, %s41
      %p45 = pneg %p39
      %p46 = scmp.eq.s32.totalorder %s16, 1
      %p47 = por %p45, %p46
      %p48 = scmp.ne.s32.totalorder %s40, %s43
      %p49 = scmp.eq.s32.totalorder %s16, 0
      %p50 = por %p48, %p49
      %p51 = scmp.ne.s32.totalorder %s40, %s43
      %p52 = scmp.eq.s32.totalorder %s21, 1
      %p53 = por %p51, %p52
      %p54 = scmp.ne.s32.totalorder %s43, %s44
      %p55 = scmp.eq.s32.totalorder %s21, 0
      %p56 = por %p54, %p55
      %p57 = scmp.ne.s32.totalorder %s43, %s44
      %p58 = scmp.eq.s32.totalorder %s22, 1
      %p59 = por %p57, %p58
      %p61 = scmp.ne.s32.totalorder %s44, %s60
      %p62 = scmp.eq.s32.totalorder %s22, 0
      %p63 = por %p61, %p62
      %s65 = sadd.s32 %s64, 1
      %p68 = scmp.eq.s32.totalorder %s16, 1
      %p69 = scmp.ne.s32.totalorder %s64, %s66
      %p70 = scmp.eq.s32.totalorder %s16, 0
      %p71 = por %p69, %p70
      %p72 = scmp.ne.s32.totalorder %s64, %s66
      %p73 = scmp.eq.s32.totalorder %s21, 1
      %p74 = por %p72, %p73
      %p75 = scmp.ne.s32.totalorder %s66, %s67
      %p76 = scmp.eq.s32.totalorder %s21, 0
      %p77 = por %p75, %p76
      %p78 = scmp.ne.s32.totalorder %s66, %s67
      %p79 = scmp.eq.s32.totalorder %s22, 1
      %p80 = por %p78, %p79
      %p82 = scmp.ne.s32.totalorder %s67, %s81
      %p83 = scmp.eq.s32.totalorder %s22, 0
      %p84 = por %p82, %p83
      %s86 = sadd.s32 %s85, 1
      %p89 = scmp.eq.s32.totalorder %s16, 1
      %p90 = scmp.ne.s32.totalorder %s85, %s87
      %p91 = scmp.eq.s32.totalorder %s16, 0
      %p92 = por %p90, %p91
      %p93 = scmp.ne.s32.totalorder %s85, %s87
      %p94 = scmp.eq.s32.totalorder %s21, 1
      %p95 = por %p93, %p94
      %p96 = scmp.ne.s32.totalorder %s87, %s88
      %p97 = scmp.eq.s32.totalorder %s21, 0
      %p98 = por %p96, %p97
      %p99 = scmp.ne.s32.totalorder %s87, %s88
      %p100 = scmp.eq.s32.totalorder %s22, 1
      %p101 = por %p99, %p100
      %p103 = scmp.ne.s32.totalorder %s88, %s102
      %p104 = scmp.eq.s32.totalorder %s22, 0
      %p105 = por %p103, %p104
      %s106 = ssub.s32 %s23, %s35
      %s107 = ssub.s32 %s24, %s31
      %s108 = sor.u32 %s106, %s107
      %p109 = scmp.eq.s32.totalorder %s108, 0
      %s111 = sadd.s32 %s110, 1
      %s112 = scalar_select %p109, %s110, %s111
      %p115 = pneg %p109
      %p116 = scmp.eq.s32.totalorder %s16, 1
      %p117 = por %p115, %p116
      %p118 = scmp.ne.s32.totalorder %s110, %s113
      %p119 = scmp.eq.s32.totalorder %s16, 0
      %p120 = por %p118, %p119
      %p121 = scmp.ne.s32.totalorder %s110, %s113
      %p122 = scmp.eq.s32.totalorder %s21, 1
      %p123 = por %p121, %p122
      %p124 = scmp.ne.s32.totalorder %s113, %s114
      %p125 = scmp.eq.s32.totalorder %s21, 0
      %p126 = por %p124, %p125
      %p127 = scmp.ne.s32.totalorder %s113, %s114
      %p128 = scmp.eq.s32.totalorder %s22, 1
      %p129 = por %p127, %p128
      %p131 = scmp.ne.s32.totalorder %s114, %s130
      %p132 = scmp.eq.s32.totalorder %s22, 0
      %p133 = por %p131, %p132
      %p134 = scmp.le.s32.totalorder 1, %s16
      %p135 = scmp.lt.s32.totalorder %s16, 3
      %p136 = pnand %p134, %p135
      %p137 = pneg %p136
      // Predicated region
      $region9: #{forward.1} parent=5 // pred_check
        _
      $region10: #{forward.1} parent=5 // pred_check_branch
        %139 = sbr.rel (%p136) target = $region12
      $region11: #{forward.1} parent=5 // pred_region
        %s140 = ssub.s32 %s16, 1
        // Predicated region
        $region13: #{forward.1} parent=11 // pred_check
          %p141 = pneg %p77
        $region14: #{forward.1} parent=11 // pred_check_branch
          %143 = sbr.rel (%p141) target = $region16
        $region15: #{forward.1} parent=11 // pred_region
          %145 = vsyncadd [#allocation6], 0
          %s146 = sshll.u32 %s1, 4
          %s147 = int_to_ptr.hbm [resolvable:$true] %s146
          %s148 = sshll.u32 [#allocation5], 4
          %s149 = int_to_ptr.vmem [resolvable:$true] %s148
          %154 = dma.hbm_to_vmem [thread:$0]  %s147, 1024, %s149, [#allocation6], 128, 128, 8
        $region16: #{forward.1} parent=11 // pred_fallthru
          _
        // Predicated region
        $region17: #{forward.1} parent=11 // pred_check
          %p155 = pneg %p98
        $region18: #{forward.1} parent=11 // pred_check_branch
          %157 = sbr.rel (%p155) target = $region20
        $region19: #{forward.1} parent=11 // pred_region
          %159 = vsyncadd [#allocation6], 0
          %s160 = sshll.u32 %s2, 4
          %s161 = int_to_ptr.hbm [resolvable:$true] %s160
          %s162 = sshll.u32 [#allocation7], 4
          %s163 = int_to_ptr.vmem [resolvable:$true] %s162
          %168 = dma.hbm_to_vmem [thread:$0]  %s161, 1024, %s163, [#allocation6], 128, 128, 8
        $region20: #{forward.1} parent=11 // pred_fallthru
          _
      $region12: #{forward.1} parent=5 // pred_fallthru
        _
      %p169 = scmp.lt.s32.totalorder %s16, 2
      // Predicated region
      $region21: #{forward.1} parent=5 // pred_check
        %p170 = pneg %p169
      $region22: #{forward.1} parent=5 // pred_check_branch
        %172 = sbr.rel (%p170) target = $region24
      $region23: #{forward.1} parent=5 // pred_region
        // Predicated region
        $region25: #{forward.1} parent=23 // pred_check
          %p173 = pneg %p50
        $region26: #{forward.1} parent=23 // pred_check_branch
          %175 = sbr.rel (%p173) target = $region28
        $region27: #{forward.1} parent=23 // pred_region
          %s176 = sand.u32 %s40, 1
          %s177 = scalar_lea.sflag [#allocation3], %s176
          %s178 = sand.u32 %s40, 1
          %s179 = smul.addr %s178, 64
          %s180 = scalar_lea.vmem [#allocation2], %s179
          %182 = vsyncadd %s177, 0
          %s183 = smul.addr %s23, 8
          %s184 = sadd.s32 %s24, %s183
          %s185 = smul.addr %s184, 8
          %s186 = scalar_lea.hbm %s0, %s185
          %s187 = sshll.u32 %s186, 4
          %s188 = int_to_ptr.hbm [resolvable:$true] %s187
          %s189 = sshll.u32 %s180, 4
          %s190 = int_to_ptr.vmem [resolvable:$true] %s189
          %195 = dma.hbm_to_vmem [thread:$0]  %s188, 1024, %s190, %s177, 128, 128, 8
        $region28: #{forward.1} parent=23 // pred_fallthru
          _
      $region24: #{forward.1} parent=5 // pred_fallthru
        _
      %p196 = scmp.le.s32.totalorder 1, %s16
      %p197 = scmp.lt.s32.totalorder %s16, 3
      %p198 = pnand %p196, %p197
      %p199 = pneg %p198
      // Predicated region
      $region29: #{forward.1} parent=5 // pred_check
        _
      $region30: #{forward.1} parent=5 // pred_check_branch
        %201 = sbr.rel (%p198) target = $region32
      $region31: #{forward.1} parent=5 // pred_region
        %s202 = ssub.s32 %s16, 1
        %s203 = sand.u32 %s43, 1
        %s204 = scalar_lea.sflag [#allocation3], %s203
        %s205 = sand.u32 %s43, 1
        %s206 = smul.addr %s205, 64
        %s207 = scalar_lea.vmem [#allocation2], %s206
        // Predicated region
        $region33: #{forward.1} parent=31 // pred_check
          %p208 = pneg %p56
        $region34: #{forward.1} parent=31 // pred_check_branch
          %210 = sbr.rel (%p208) target = $region36
        $region35: #{forward.1} parent=31 // pred_region
          %212 = dma.done %s204, 1024
        $region36: #{forward.1} parent=31 // pred_fallthru
          _
        // Predicated region
        $region37: #{forward.1} parent=31 // pred_check
          %p213 = pneg %p77
        $region38: #{forward.1} parent=31 // pred_check_branch
          %215 = sbr.rel (%p213) target = $region40
        $region39: #{forward.1} parent=31 // pred_region
          %217 = dma.done [#allocation6], 1024
        $region40: #{forward.1} parent=31 // pred_fallthru
          _
        // Predicated region
        $region41: #{forward.1} parent=31 // pred_check
          %p218 = pneg %p98
        $region42: #{forward.1} parent=31 // pred_check_branch
          %220 = sbr.rel (%p218) target = $region44
        $region43: #{forward.1} parent=31 // pred_region
          %222 = dma.done [#allocation6], 1024
        $region44: #{forward.1} parent=31 // pred_fallthru
          _
        %s223 = sand.u32 %s43, 1
        %s224 = scalar_lea.sflag [#allocation3], %s223
        %s225 = sand.u32 %s43, 1
        %s226 = smul.addr %s225, 64
        %s227 = scalar_lea.vmem [#allocation2], %s226
        %p228 = pneg %p56
        %p229 = pneg %p53
        %p230 = pneg %p77
        %p231 = pneg %p74
        %p232 = pneg %p98
        %p233 = pneg %p95
        %p234 = pneg %p126
        %p235 = pneg %p123
        %s236 = sand.u32 %s113, 1
        %s237 = scalar_lea.sflag [#allocation4], %s236
        %s238 = sand.u32 %s113, 1
        %s239 = smul.addr %s238, 64
        %s240 = scalar_lea.vmem [#allocation8], %s239
        %v241 = vld [vmem:[#allocation5] sm:$0xff]
        %v242 = vld [vmem:[#allocation5 + $0x8] sm:$0xff]
        %v243 = vld [vmem:[#allocation5 + $0x10] sm:$0xff]
        %v244 = vld [vmem:[#allocation5 + $0x18] sm:$0xff]
        %v245 = vld [vmem:[#allocation5 + $0x20] sm:$0xff]
        %v246 = vld [vmem:[#allocation5 + $0x28] sm:$0xff]
        %v247 = vld [vmem:[#allocation5 + $0x30] sm:$0xff]
        %v248 = vld [vmem:[#allocation5 + $0x38] sm:$0xff]
        %v249 = vld [vmem:[#allocation7] sm:$0xff]
        %v250 = vld [vmem:[#allocation7 + $0x8] sm:$0xff]
        %v251 = vld [vmem:[#allocation7 + $0x10] sm:$0xff]
        %v252 = vld [vmem:[#allocation7 + $0x18] sm:$0xff]
        %v253 = vld [vmem:[#allocation7 + $0x20] sm:$0xff]
        %v254 = vld [vmem:[#allocation7 + $0x28] sm:$0xff]
        %v255 = vld [vmem:[#allocation7 + $0x30] sm:$0xff]
        %v256 = vld [vmem:[#allocation7 + $0x38] sm:$0xff]
        %v257 = vld [vmem:[%s207] sm:$0xff]
        %v258 = vld [vmem:[%s207 + $0x8] sm:$0xff]
        %v259 = vld [vmem:[%s207 + $0x10] sm:$0xff]
        %v260 = vld [vmem:[%s207 + $0x18] sm:$0xff]
        %v261 = vld [vmem:[%s207 + $0x20] sm:$0xff]
        %v262 = vld [vmem:[%s207 + $0x28] sm:$0xff]
        %v263 = vld [vmem:[%s207 + $0x30] sm:$0xff]
        %v264 = vld [vmem:[%s207 + $0x38] sm:$0xff]
        %266 = vset.pattern.permute.xlu0 0
        %267 = vperm.xlu0 %266, %v249
        %v268 = vpop.permute.xlu0 %267
        %271 = vset.pattern.permute.xlu0 0
        %272 = vperm.xlu0 %271, %v250
        %v273 = vpop.permute.xlu0 %272
        %276 = vset.pattern.permute.xlu0 0
        %277 = vperm.xlu0 %276, %v251
        %v278 = vpop.permute.xlu0 %277
        %281 = vset.pattern.permute.xlu0 0
        %282 = vperm.xlu0 %281, %v252
        %v283 = vpop.permute.xlu0 %282
        %286 = vset.pattern.permute.xlu0 0
        %287 = vperm.xlu0 %286, %v253
        %v288 = vpop.permute.xlu0 %287
        %291 = vset.pattern.permute.xlu0 0
        %292 = vperm.xlu0 %291, %v254
        %v293 = vpop.permute.xlu0 %292
        %296 = vset.pattern.permute.xlu0 0
        %297 = vperm.xlu0 %296, %v255
        %v298 = vpop.permute.xlu0 %297
        %301 = vset.pattern.permute.xlu0 0
        %302 = vperm.xlu0 %301, %v256
        %v303 = vpop.permute.xlu0 %302
        %vm305 = vcmask 523264
        %v307 = vsel %vm305, %v241, 0
        %v310 = vsel %vm305, %v242, 0
        %v313 = vsel %vm305, %v243, 0
        %v316 = vsel %vm305, %v244, 0
        %v319 = vsel %vm305, %v245, 0
        %v322 = vsel %vm305, %v246, 0
        %v325 = vsel %vm305, %v247, 0
        %v328 = vsel %vm305, %v248, 0
        %330 = vmatpush.msra.mxu0 0.0
        %331 = vmatpush.msra.mxu0 0.0
        %332 = vmatpush.msra.mxu0 0.0
        %333 = vmatpush.msra.mxu0 0.0
        %334 = vmatpush.msra.mxu0 0.0
        %335 = vmatpush.msra.mxu0 0.0
        %336 = vmatpush.msra.mxu0 0.0
        %337 = vmatpush.msra.mxu0 0.0
        %338 = vmatpush.msra.mxu0 %v264
        %339 = vmatpush.msra.mxu0 %v263
        %340 = vmatpush.msra.mxu0 %v262
        %341 = vmatpush.msra.mxu0 %v261
        %342 = vmatpush.msra.mxu0 %v260
        %343 = vmatpush.msra.mxu0 %v259
        %344 = vmatpush.msra.mxu0 %v258
        %345 = vmatpush.msra.mxu0 %v257
        %346 = vmatmul.f32.gmra.mxu0 %v307
        %v347 = vpop.f32.mrf.mxu0
        %v348 = vadd.f32 %v268, %v347
        %349 = vmatmul.f32.gmra.mxu0 %v310
        %v350 = vpop.f32.mrf.mxu0
        %v351 = vadd.f32 %v273, %v350
        %352 = vmatmul.f32.gmra.mxu0 %v313
        %v353 = vpop.f32.mrf.mxu0
        %v354 = vadd.f32 %v278, %v353
        %355 = vmatmul.f32.gmra.mxu0 %v316
        %v356 = vpop.f32.mrf.mxu0
        %v357 = vadd.f32 %v283, %v356
        %358 = vmatmul.f32.gmra.mxu0 %v319
        %v359 = vpop.f32.mrf.mxu0
        %v360 = vadd.f32 %v288, %v359
        %361 = vmatmul.f32.gmra.mxu0 %v322
        %v362 = vpop.f32.mrf.mxu0
        %v363 = vadd.f32 %v293, %v362
        %364 = vmatmul.f32.gmra.mxu0 %v325
        %v365 = vpop.f32.mrf.mxu0
        %v366 = vadd.f32 %v298, %v365
        %367 = vmatmul.f32.gmra.mxu0 %v328
        %v368 = vpop.f32.mrf.mxu0
        %v369 = vadd.f32 %v303, %v368
        %370 = vdwg.mxu0
        %371 = vst [vmem:[%s240] sm:$0xff] %v348
        %372 = vst [vmem:[%s240 + $0x8] sm:$0xff] %v351
        %373 = vst [vmem:[%s240 + $0x10] sm:$0xff] %v354
        %374 = vst [vmem:[%s240 + $0x18] sm:$0xff] %v357
        %375 = vst [vmem:[%s240 + $0x20] sm:$0xff] %v360
        %376 = vst [vmem:[%s240 + $0x28] sm:$0xff] %v363
        %377 = vst [vmem:[%s240 + $0x30] sm:$0xff] %v366
        %378 = vst [vmem:[%s240 + $0x38] sm:$0xff] %v369
        %s379 = sand.u32 %s113, 1
        %s380 = scalar_lea.sflag [#allocation4], %s379
        %s381 = sand.u32 %s113, 1
        %s382 = smul.addr %s381, 64
        %s383 = scalar_lea.vmem [#allocation8], %s382
        // Predicated region
        $region45: #{forward.1} parent=31 // pred_check
          %p384 = pneg %p123
        $region46: #{forward.1} parent=31 // pred_check_branch
          %386 = sbr.rel (%p384) target = $region48
        $region47: #{forward.1} parent=31 // pred_region
          %388 = vsyncadd %s380, 0
          %s389 = smul.addr %s25, 8
          %s390 = sadd.s32 %s26, %s389
          %s391 = smul.addr %s390, 8
          %s392 = scalar_lea.hbm %s3, %s391
          %s393 = sshll.u32 %s383, 4
          %s394 = int_to_ptr.vmem [resolvable:$true] %s393
          %s395 = sshll.u32 %s392, 4
          %s396 = int_to_ptr.hbm [resolvable:$true] %s395
          %401 = dma.vmem_to_hbm [thread:$0]  %s394, 1024, %s396, %s380, 128, 128, 8
        $region48: #{forward.1} parent=31 // pred_fallthru
          _
      $region32: #{forward.1} parent=5 // pred_fallthru
        _
      %p402 = scmp.le.s32.totalorder 2, %s16
      // Predicated region
      $region49: #{forward.1} parent=5 // pred_check
        %p403 = pneg %p402
      $region50: #{forward.1} parent=5 // pred_check_branch
        %405 = sbr.rel (%p403) target = $region52
      $region51: #{forward.1} parent=5 // pred_region
        %s406 = ssub.s32 %s16, 2
        // Predicated region
        $region53: #{forward.1} parent=51 // pred_check
          %p407 = pneg %p129
        $region54: #{forward.1} parent=51 // pred_check_branch
          %409 = sbr.rel (%p407) target = $region56
        $region55: #{forward.1} parent=51 // pred_region
          %s410 = sand.u32 %s114, 1
          %s411 = scalar_lea.sflag [#allocation4], %s410
          %s412 = sand.u32 %s114, 1
          %s413 = smul.addr %s412, 64
          %s414 = scalar_lea.vmem [#allocation8], %s413
          %416 = dma.done %s411, 1024
        $region56: #{forward.1} parent=51 // pred_fallthru
          _
      $region52: #{forward.1} parent=5 // pred_fallthru
        _
    $region6: #{forward.1} parent=1 // loop_footer
      %s20 = sadd.s32 1, %s16
    $region7: #{forward.1} parent=1 // loop_footer_branch
      %15 = sbr.rel target = $region3
    $region8: #{forward.1} parent=1 // loop_exit
      _
    %417 = vsyncpa [#allocation3], 1
    %s418 = scalar_lea.sflag [#allocation3], 1
    %419 = vsyncpa %s418, 1
    %420 = vsyncpa [#allocation6], 1
    %421 = vsyncpa [#allocation4], 1
    %s422 = scalar_lea.sflag [#allocation4], 1
    %423 = vsyncpa %s422, 1

</llo_original>
